<compile_context>
chip_gen: v7x
topology: tpu7x:2x2x1
jax: 0.10.0
libtpu: 0.0.40
codegen_flags: <defaults>
</compile_context>

<pallas_src>
import functools

import jax
import jax.numpy as jnp
from jax import lax
from jax.experimental import pallas as pl
from jax.experimental.pallas import tpu as pltpu

BN_EPS = 1e-5


def _round_up(x, m):
    return (x + m - 1) // m * m


def _stats_kernel(x_ref, w_ref, gamma_ref, beta_ref,
                  scale_ref, shift_ref,
                  sum_ref, sq_ref, *, m_true):
    """Pass 1: accumulate per-channel sum / sum-of-squares of y = x @ W,
    finalize fused BN scale/shift on the last grid step."""
    i = pl.program_id(0)

    @pl.when(i == 0)
    def _():
        sum_ref[...] = jnp.zeros_like(sum_ref)
        sq_ref[...] = jnp.zeros_like(sq_ref)

    y = jnp.dot(x_ref[...], w_ref[...], preferred_element_type=jnp.float32)
    sum_ref[...] += jnp.sum(y, axis=0, keepdims=True)
    sq_ref[...] += jnp.sum(y * y, axis=0, keepdims=True)

    @pl.when(i == pl.num_programs(0) - 1)
    def _():
        inv_m = jnp.float32(1.0 / m_true)
        mean = sum_ref[...] * inv_m
        # E[y^2] - E[y]^2 in f32; clamp at 0 against tiny negative rounding.
        var = jnp.maximum(sq_ref[...] * inv_m - mean * mean, 0.0)
        sc = gamma_ref[...] * lax.rsqrt(var + BN_EPS)
        scale_ref[...] = sc
        shift_ref[...] = beta_ref[...] - mean * sc


def _apply_kernel(x_ref, w_ref, scale_ref, shift_ref, o_ref):
    """Pass 2: y = x @ W, then one fused multiply-add per element."""
    y = jnp.dot(x_ref[...], w_ref[...], preferred_element_type=jnp.float32)
    o_ref[...] = (y * scale_ref[...] + shift_ref[...]).astype(o_ref.dtype)


def downsample(x, w, b, gamma, beta, *, block_m=512):
    """x: [N, Cin, H, W] (NCHW). Returns [N, Cout, Ho, Wo], BN in training mode."""
    del b  # Conv bias cancels exactly under BatchNorm (mean subtraction).

    n, cin, h, wdim = x.shape
    cout = w.shape[0]
    ho = (h - 1) // 2 + 1
    wo = (wdim - 1) // 2 + 1
    m = n * ho * wo

    # Strided subsample + NHWC flatten (single XLA copy in the wrapper).
    xs = jnp.transpose(x, (0, 2, 3, 1))[:, ::2, ::2, :]        # [N, Ho, Wo, Cin]
    xm = xs.reshape(m, cin).astype(jnp.float32)                # [M, Cin]

    # Lane-dense output channels; sublane-aligned M tiling.
    cout_pad = _round_up(cout, 128)
    block_m = _round_up(min(block_m, _round_up(m, 8)), 8)
    m_pad = _round_up(m, block_m)
    n_tiles = m_pad // block_m

    if m_pad != m:
        xm = jnp.pad(xm, ((0, m_pad - m), (0, 0)))             # zero rows: no effect on sums

    w_mat = jnp.pad(w.reshape(cout, cin).T.astype(jnp.float32),
                    ((0, 0), (0, cout_pad - cout)))            # [Cin, Cout_pad]
    g2 = jnp.pad(gamma.astype(jnp.float32), (0, cout_pad - cout)).reshape(1, cout_pad)
    be2 = jnp.pad(beta.astype(jnp.float32), (0, cout_pad - cout)).reshape(1, cout_pad)

    matmul_flops = 2 * m_pad * cin * cout_pad
    x_bytes = m_pad * cin * 4
    w_bytes = cin * cout_pad * 4

    # ---- Pass 1: global BN statistics -> fused per-channel scale/shift ----
    scale, shift = pl.pallas_call(
        functools.partial(_stats_kernel, m_true=m),
        out_shape=(jax.ShapeDtypeStruct((1, cout_pad), jnp.float32),
                   jax.ShapeDtypeStruct((1, cout_pad), jnp.float32)),
        grid=(n_tiles,),
        in_specs=[
            pl.BlockSpec((block_m, cin), lambda i: (i, 0)),
            pl.BlockSpec((cin, cout_pad), lambda i: (0, 0)),
            pl.BlockSpec((1, cout_pad), lambda i: (0, 0)),
            pl.BlockSpec((1, cout_pad), lambda i: (0, 0)),
        ],
        out_specs=(pl.BlockSpec((1, cout_pad), lambda i: (0, 0)),
                   pl.BlockSpec((1, cout_pad), lambda i: (0, 0))),
        scratch_shapes=[pltpu.VMEM((1, cout_pad), jnp.float32),
                        pltpu.VMEM((1, cout_pad), jnp.float32)],
        compiler_params=pltpu.CompilerParams(
            dimension_semantics=("arbitrary",)),
        cost_estimate=pl.CostEstimate(
            flops=matmul_flops,
            transcendentals=cout_pad,
            bytes_accessed=x_bytes + w_bytes + 4 * cout_pad * 4),
    )(xm, w_mat, g2, be2)

    # ---- Pass 2: recompute matmul (Cin tiny) + fused normalize, streaming ----
    out = pl.pallas_call(
        _apply_kernel,
        out_shape=jax.ShapeDtypeStruct((m_pad, cout_pad), jnp.float32),
        grid=(n_tiles,),
        in_specs=[
            pl.BlockSpec((block_m, cin), lambda i: (i, 0)),
            pl.BlockSpec((cin, cout_pad), lambda i: (0, 0)),
            pl.BlockSpec((1, cout_pad), lambda i: (0, 0)),
            pl.BlockSpec((1, cout_pad), lambda i: (0, 0)),
        ],
        out_specs=pl.BlockSpec((block_m, cout_pad), lambda i: (i, 0)),
        compiler_params=pltpu.CompilerParams(
            dimension_semantics=("parallel",)),
        cost_estimate=pl.CostEstimate(
            flops=matmul_flops,
            transcendentals=0,
            bytes_accessed=x_bytes + w_bytes + m_pad * cout_pad * 4),
    )(xm, w_mat, scale, shift)

    out = out[:m, :cout]
    return jnp.transpose(out.reshape(n, ho, wo, cout), (0, 3, 1, 2))


def reference(x, w, b, gamma, beta):
    """Pure-JAX reference matching PyTorch Conv2d(1x1, stride 2) + BatchNorm2d (training)."""
    xs = x[:, :, ::2, ::2]
    y = jnp.einsum("ncij,oc->noij", xs, w.reshape(w.shape[0], w.shape[1])) \
        + b[None, :, None, None]
    mean = jnp.mean(y, axis=(0, 2, 3), keepdims=True)
    var = jnp.mean((y - mean) ** 2, axis=(0, 2, 3), keepdims=True)
    return (y - mean) / jnp.sqrt(var + BN_EPS) * gamma[None, :, None, None] \
        + beta[None, :, None, None]


if __name__ == "__main__":
    N, CIN, COUT, H, W = 2, 4, 8, 16, 16

    key = jax.random.PRNGKey(0)
    kx, kw, kb = jax.random.split(key, 3)

    x = jax.random.normal(kx, (N, CIN, H, W), dtype=jnp.float32)

    # Conv2d(in=CIN, out=COUT, kernel=1x1) params, kaiming-uniform-like init.
    fan_in = CIN * 1 * 1
    bound = 1.0 / (fan_in ** 0.5)
    conv_w = jax.random.uniform(kw, (COUT, CIN, 1, 1), jnp.float32, -bound, bound)
    conv_b = jax.random.uniform(kb, (COUT,), jnp.float32, -bound, bound)

    # BatchNorm2d defaults: weight=1, bias=0.
    bn_gamma = jnp.ones((COUT,), jnp.float32)
    bn_beta = jnp.zeros((COUT,), jnp.float32)

    # block_m=32 -> 4 M-tiles at this toy size, exercising the multi-tile
    # stats accumulation; default block_m=512 for realistic shapes.
    out = downsample(x, conv_w, conv_b, bn_gamma, bn_beta, block_m=32)
    out = jax.block_until_ready(out)

    ref = reference(x, conv_w, conv_b, bn_gamma, bn_beta)
    assert out.shape == (N, COUT, H // 2, W // 2), out.shape
    assert jnp.allclose(out, ref, atol=1e-4, rtol=1e-4), float(jnp.max(jnp.abs(out - ref)))

    print("KERNEL_OK")
</pallas_src>

<mosaic_0001>
module attributes {stable_mosaic.version = 11 : i64} {
  func.func @_stats_kernel(%arg0: i32, %arg1: memref<32x4xf32, #tpu.memory_space<vmem>>, %arg2: memref<4x128xf32, #tpu.memory_space<vmem>>, %arg3: memref<1x128xf32, #tpu.memory_space<vmem>>, %arg4: memref<1x128xf32, #tpu.memory_space<vmem>>, %arg5: memref<1x128xf32, #tpu.memory_space<vmem>>, %arg6: memref<1x128xf32, #tpu.memory_space<vmem>>, %arg7: memref<1x128xf32, #tpu.memory_space<vmem>>, %arg8: memref<1x128xf32, #tpu.memory_space<vmem>>) attributes {dimension_semantics = [#tpu.dimension_semantics<arbitrary>], iteration_bounds = array<i64: 4>, scalar_prefetch = 0 : i64, scratch_operands = 2 : i64, tpu.core_type = #tpu.core_type<tc>, window_params = [{transform_indices = @transform_0, window_bounds = array<i64: 32, 4>}, {pipeline_mode = #tpu.pipeline_mode<synchronous>, transform_indices = @transform_1, window_bounds = array<i64: 4, 128>}, {pipeline_mode = #tpu.pipeline_mode<synchronous>, transform_indices = @transform_2, window_bounds = array<i64: 1, 128>}, {pipeline_mode = #tpu.pipeline_mode<synchronous>, transform_indices = @transform_3, window_bounds = array<i64: 1, 128>}, {pipeline_mode = #tpu.pipeline_mode<synchronous>, transform_indices = @transform_4, window_bounds = array<i64: 1, 128>}, {pipeline_mode = #tpu.pipeline_mode<synchronous>, transform_indices = @transform_5, window_bounds = array<i64: 1, 128>}]} {
    %c0_i32 = arith.constant 0 : i32
    %0 = arith.cmpi eq, %arg0, %c0_i32 : i32
    %1 = arith.extui %0 : i1 to i32
    %c0_i32_0 = arith.constant 0 : i32
    %2 = arith.cmpi ne, %1, %c0_i32_0 : i32
    scf.if %2 {
      %cst_15 = arith.constant 0.000000e+00 : f32
      %20 = vector.broadcast %cst_15 : f32 to vector<1x128xf32>
      %c0_16 = arith.constant 0 : index
      %c0_17 = arith.constant 0 : index
      %21 = vector.load %arg7[%c0_16, %c0_17] : memref<1x128xf32, #tpu.memory_space<vmem>>, vector<1x128xf32>
      tpu.vector_store %arg7[%c0_16, %c0_17], %20 {strides = array<i32>} : memref<1x128xf32, #tpu.memory_space<vmem>>, vector<1x128xf32>,
      %cst_18 = arith.constant 0.000000e+00 : f32
      %22 = vector.broadcast %cst_18 : f32 to vector<1x128xf32>
      %c0_19 = arith.constant 0 : index
      %c0_20 = arith.constant 0 : index
      %23 = vector.load %arg8[%c0_19, %c0_20] : memref<1x128xf32, #tpu.memory_space<vmem>>, vector<1x128xf32>
      tpu.vector_store %arg8[%c0_19, %c0_20], %22 {strides = array<i32>} : memref<1x128xf32, #tpu.memory_space<vmem>>, vector<1x128xf32>,
    } else {
    }
    %c0 = arith.constant 0 : index
    %c0_1 = arith.constant 0 : index
    %3 = vector.load %arg1[%c0, %c0_1] : memref<32x4xf32, #tpu.memory_space<vmem>>, vector<32x4xf32>
    %c0_2 = arith.constant 0 : index
    %c0_3 = arith.constant 0 : index
    %4 = vector.load %arg2[%c0_2, %c0_3] : memref<4x128xf32, #tpu.memory_space<vmem>>, vector<4x128xf32>
    %cst = arith.constant dense<0.000000e+00> : vector<32x128xf32>
    %5 = tpu.matmul %3, %4, %cst {dimension_numbers = #tpu.dot_dimension_numbers<[1], [0], [0], [1], [0, 0, 1, 1], [], []>} : vector<32x4xf32>, vector<4x128xf32>, vector<32x128xf32> -> vector<32x128xf32>
    %c0_4 = arith.constant 0 : index
    %c0_5 = arith.constant 0 : index
    %6 = vector.load %arg7[%c0_4, %c0_5] : memref<1x128xf32, #tpu.memory_space<vmem>>, vector<1x128xf32>
    %cst_6 = arith.constant dense<0.000000e+00> : vector<128xf32>
    %7 = vector.multi_reduction <add>, %5, %cst_6 [0] : vector<32x128xf32> to vector<128xf32>
    %8 = vector.shape_cast %7 : vector<128xf32> to vector<1x128xf32>
    %9 = arith.addf %6, %8 : vector<1x128xf32>
    %c0_7 = arith.constant 0 : index
    %c0_8 = arith.constant 0 : index
    %10 = vector.load %arg7[%c0_7, %c0_8] : memref<1x128xf32, #tpu.memory_space<vmem>>, vector<1x128xf32>
    tpu.vector_store %arg7[%c0_7, %c0_8], %9 {strides = array<i32>} : memref<1x128xf32, #tpu.memory_space<vmem>>, vector<1x128xf32>,
    %c0_9 = arith.constant 0 : index
    %c0_10 = arith.constant 0 : index
    %11 = vector.load %arg8[%c0_9, %c0_10] : memref<1x128xf32, #tpu.memory_space<vmem>>, vector<1x128xf32>
    %12 = arith.mulf %5, %5 : vector<32x128xf32>
    %cst_11 = arith.constant dense<0.000000e+00> : vector<128xf32>
    %13 = vector.multi_reduction <add>, %12, %cst_11 [0] : vector<32x128xf32> to vector<128xf32>
    %14 = vector.shape_cast %13 : vector<128xf32> to vector<1x128xf32>
    %15 = arith.addf %11, %14 : vector<1x128xf32>
    %c0_12 = arith.constant 0 : index
    %c0_13 = arith.constant 0 : index
    %16 = vector.load %arg8[%c0_12, %c0_13] : memref<1x128xf32, #tpu.memory_space<vmem>>, vector<1x128xf32>
    tpu.vector_store %arg8[%c0_12, %c0_13], %15 {strides = array<i32>} : memref<1x128xf32, #tpu.memory_space<vmem>>, vector<1x128xf32>,
    %c3_i32 = arith.constant 3 : i32
    %17 = arith.cmpi eq, %arg0, %c3_i32 : i32
    %18 = arith.extui %17 : i1 to i32
    %c0_i32_14 = arith.constant 0 : i32
    %19 = arith.cmpi ne, %18, %c0_i32_14 : i32
    scf.if %19 {
      %c0_15 = arith.constant 0 : index
      %c0_16 = arith.constant 0 : index
      %20 = vector.load %arg7[%c0_15, %c0_16] : memref<1x128xf32, #tpu.memory_space<vmem>>, vector<1x128xf32>
      %cst_17 = arith.constant 7.812500e-03 : f32
      %21 = vector.broadcast %cst_17 : f32 to vector<1x128xf32>
      %22 = arith.mulf %20, %21 : vector<1x128xf32>
      %c0_18 = arith.constant 0 : index
      %c0_19 = arith.constant 0 : index
      %23 = vector.load %arg8[%c0_18, %c0_19] : memref<1x128xf32, #tpu.memory_space<vmem>>, vector<1x128xf32>
      %cst_20 = arith.constant 7.812500e-03 : f32
      %24 = vector.broadcast %cst_20 : f32 to vector<1x128xf32>
      %25 = arith.mulf %23, %24 : vector<1x128xf32>
      %26 = arith.mulf %22, %22 : vector<1x128xf32>
      %27 = arith.subf %25, %26 : vector<1x128xf32>
      %cst_21 = arith.constant 0.000000e+00 : f32
      %28 = vector.broadcast %cst_21 : f32 to vector<1x128xf32>
      %29 = arith.maximumf %27, %28 : vector<1x128xf32>
      %c0_22 = arith.constant 0 : index
      %c0_23 = arith.constant 0 : index
      %30 = vector.load %arg3[%c0_22, %c0_23] : memref<1x128xf32, #tpu.memory_space<vmem>>, vector<1x128xf32>
      %cst_24 = arith.constant 9.99999974E-6 : f32
      %31 = vector.broadcast %cst_24 : f32 to vector<1x128xf32>
      %32 = arith.addf %29, %31 : vector<1x128xf32>
      %33 = math.rsqrt %32 : vector<1x128xf32>
      %34 = arith.mulf %30, %33 : vector<1x128xf32>
      %c0_25 = arith.constant 0 : index
      %c0_26 = arith.constant 0 : index
      %35 = vector.load %arg5[%c0_25, %c0_26] : memref<1x128xf32, #tpu.memory_space<vmem>>, vector<1x128xf32>
      tpu.vector_store %arg5[%c0_25, %c0_26], %34 {strides = array<i32>} : memref<1x128xf32, #tpu.memory_space<vmem>>, vector<1x128xf32>,
      %c0_27 = arith.constant 0 : index
      %c0_28 = arith.constant 0 : index
      %36 = vector.load %arg4[%c0_27, %c0_28] : memref<1x128xf32, #tpu.memory_space<vmem>>, vector<1x128xf32>
      %37 = arith.mulf %22, %34 : vector<1x128xf32>
      %38 = arith.subf %36, %37 : vector<1x128xf32>
      %c0_29 = arith.constant 0 : index
      %c0_30 = arith.constant 0 : index
      %39 = vector.load %arg6[%c0_29, %c0_30] : memref<1x128xf32, #tpu.memory_space<vmem>>, vector<1x128xf32>
      tpu.vector_store %arg6[%c0_29, %c0_30], %38 {strides = array<i32>} : memref<1x128xf32, #tpu.memory_space<vmem>>, vector<1x128xf32>,
    } else {
    }
    return
  }
  func.func @transform_0(%arg0: i32) -> (i32, i32) {
    %c0_i32 = arith.constant 0 : i32
    %c0_i32_0 = arith.constant 0 : i32
    return %arg0, %c0_i32 : i32, i32
  }
  func.func @transform_1(%arg0: i32) -> (i32, i32) {
    %c0_i32 = arith.constant 0 : i32
    %c0_i32_0 = arith.constant 0 : i32
    %c0_i32_1 = arith.constant 0 : i32
    return %c0_i32, %c0_i32_0 : i32, i32
  }
  func.func @transform_2(%arg0: i32) -> (i32, i32) {
    %c0_i32 = arith.constant 0 : i32
    %c0_i32_0 = arith.constant 0 : i32
    %c0_i32_1 = arith.constant 0 : i32
    return %c0_i32, %c0_i32_0 : i32, i32
  }
  func.func @transform_3(%arg0: i32) -> (i32, i32) {
    %c0_i32 = arith.constant 0 : i32
    %c0_i32_0 = arith.constant 0 : i32
    %c0_i32_1 = arith.constant 0 : i32
    return %c0_i32, %c0_i32_0 : i32, i32
  }
  func.func @transform_4(%arg0: i32) -> (i32, i32) {
    %c0_i32 = arith.constant 0 : i32
    %c0_i32_0 = arith.constant 0 : i32
    %c0_i32_1 = arith.constant 0 : i32
    return %c0_i32, %c0_i32_0 : i32, i32
  }
  func.func @transform_5(%arg0: i32) -> (i32, i32) {
    %c0_i32 = arith.constant 0 : i32
    %c0_i32_0 = arith.constant 0 : i32
    %c0_i32_1 = arith.constant 0 : i32
    return %c0_i32, %c0_i32_0 : i32, i32
  }
}

</mosaic_0001>

<llo_original>
// kernel: tpu_custom_call.1
$region0: #{tpu_custom_call.1}
  #allocation0 [shape = 'u32[]', space=smem, size = 0x4, offset = 0x4, fixed_abs, tag = 'smem constant byte address 0x4 - core index']
  #allocation1 [shape = 'u32[144,128]{1,0:T(1,128)}', space=vmem, size = 0x12000, scoped, tag = 'internal scratch']
  #allocation2 [shape = 'f32[1,128]{1,0:T(1,128)}', space=vmem, size = 0x200, scoped, tag = 'scratch operand']
  #allocation3 [shape = 'f32[1,128]{1,0:T(1,128)}', space=vmem, size = 0x200, scoped, tag = 'scratch operand']
  %s0 = inlined_call_operand.vmem [shape: f32[128,4], index: 0, kind: input, shape index: {}]
  %s1 = inlined_call_operand.vmem [shape: f32[4,128], index: 1, kind: input, shape index: {}]
  %s2 = inlined_call_operand.vmem [shape: f32[1,128], index: 2, kind: input, shape index: {}]
  %s3 = inlined_call_operand.vmem [shape: f32[1,128], index: 3, kind: input, shape index: {}]
  %s4 = inlined_call_operand.hbm [shape: f32[1,128], index: 4, kind: output, shape index: {0}]
  %s5 = inlined_call_operand.hbm [shape: f32[1,128], index: 5, kind: output, shape index: {1}]
  %6 = xla_tuple %s4, %s5
  %s7 = sld [smem:[#allocation0]]
  $region65: #{tpu_custom_call.1} parent=0
    _
  %s9 = ssub.s32 1, %s7
  %s10 = scalar_select 0, %s9, %s7
  $region1: #{tpu_custom_call.1} parent=0
    #allocation4 [shape = 'u8[512]{0}', space=vmem, size = 0x400, scoped, tag = 'output window, operand 0, single buffered']
    #allocation5 [shape = 's32[2]{0}', space=sflag, size = 0x8, scoped, tag = 'scoped memory for tpu_custom_call.1']
    #allocation6 [shape = 'u8[512]{0}', space=vmem, size = 0x400, scoped, tag = 'output window, operand 1, single buffered']
    #allocation7 [shape = 's32[1]{0}', space=sflag, size = 0x4, scoped, tag = 'scoped memory for tpu_custom_call.1']
    %11 = vsyncpa [#allocation5], 0
    %12 = vsyncpa [#allocation7], 0
    loop: start=0, step=1, limit=6
    $region2: #{tpu_custom_call.1} parent=1 // loop_pre_header
      _
    $region3: #{tpu_custom_call.1} parent=1 // loop_header
      %s14 = sphi 0, %s18
      %p15 = scmp.ge.s32.totalorder %s14, 6
      %s24 = sphi 0, %s26
      %s27 = sphi 0, %s24
      %s28 = sphi 0, %s27
      %s44 = sphi 0, %s28
      %s48 = sphi 0, %s48
      %s50 = sphi 0, %s48
      %s51 = sphi 0, %s50
      %s65 = sphi 0, %s51
      %s69 = sphi 0, %s69
      %s71 = sphi 0, %s69
      %s72 = sphi 0, %s71
      %s86 = sphi 0, %s72
      %s90 = sphi 0, %s90
      %s92 = sphi 0, %s90
      %s93 = sphi 0, %s92
      %s107 = sphi 0, %s93
      %s111 = sphi 0, %s111
      %s113 = sphi 0, %s111
      %s114 = sphi 0, %s113
      %s128 = sphi 0, %s114
      %s132 = sphi 0, %s132
      %s134 = sphi 0, %s132
      %s135 = sphi 0, %s134
      %s149 = sphi 0, %s135
    $region4: #{tpu_custom_call.1} parent=1 // loop_header_branch
      %17 = sbr.rel (%p15) target = $region8
    $region5: #{tpu_custom_call.1} parent=1 // loop_body
      %s19 = ssub.s32 %s14, 1
      %s20 = ssub.s32 %s14, 2
      %s21 = sadd.s32 %s14, 1
      %s22 = ssub.s32 %s14, %s21
      %p23 = scmp.eq.s32.totalorder %s22, 0
      %s25 = sadd.s32 %s24, 1
      %s26 = scalar_select %p23, %s24, %s25
      %p29 = pneg %p23
      %p30 = scmp.eq.s32.totalorder %s14, 3
      %p31 = por %p29, %p30
      %p32 = scmp.ne.s32.totalorder %s24, %s27
      %p33 = scmp.eq.s32.totalorder %s14, 0
      %p34 = por %p32, %p33
      %p35 = scmp.ne.s32.totalorder %s24, %s27
      %p36 = scmp.eq.s32.totalorder %s19, 3
      %p37 = por %p35, %p36
      %p38 = scmp.ne.s32.totalorder %s27, %s28
      %p39 = scmp.eq.s32.totalorder %s19, 0
      %p40 = por %p38, %p39
      %p41 = scmp.ne.s32.totalorder %s27, %s28
      %p42 = scmp.eq.s32.totalorder %s20, 3
      %p43 = por %p41, %p42
      %p45 = scmp.ne.s32.totalorder %s28, %s44
      %p46 = scmp.eq.s32.totalorder %s20, 0
      %p47 = por %p45, %p46
      %s49 = sadd.s32 %s48, 1
      %p52 = scmp.eq.s32.totalorder %s14, 3
      %p53 = scmp.ne.s32.totalorder %s48, %s50
      %p54 = scmp.eq.s32.totalorder %s14, 0
      %p55 = por %p53, %p54
      %p56 = scmp.ne.s32.totalorder %s48, %s50
      %p57 = scmp.eq.s32.totalorder %s19, 3
      %p58 = por %p56, %p57
      %p59 = scmp.ne.s32.totalorder %s50, %s51
      %p60 = scmp.eq.s32.totalorder %s19, 0
      %p61 = por %p59, %p60
      %p62 = scmp.ne.s32.totalorder %s50, %s51
      %p63 = scmp.eq.s32.totalorder %s20, 3
      %p64 = por %p62, %p63
      %p66 = scmp.ne.s32.totalorder %s51, %s65
      %p67 = scmp.eq.s32.totalorder %s20, 0
      %p68 = por %p66, %p67
      %s70 = sadd.s32 %s69, 1
      %p73 = scmp.eq.s32.totalorder %s14, 3
      %p74 = scmp.ne.s32.totalorder %s69, %s71
      %p75 = scmp.eq.s32.totalorder %s14, 0
      %p76 = por %p74, %p75
      %p77 = scmp.ne.s32.totalorder %s69, %s71
      %p78 = scmp.eq.s32.totalorder %s19, 3
      %p79 = por %p77, %p78
      %p80 = scmp.ne.s32.totalorder %s71, %s72
      %p81 = scmp.eq.s32.totalorder %s19, 0
      %p82 = por %p80, %p81
      %p83 = scmp.ne.s32.totalorder %s71, %s72
      %p84 = scmp.eq.s32.totalorder %s20, 3
      %p85 = por %p83, %p84
      %p87 = scmp.ne.s32.totalorder %s72, %s86
      %p88 = scmp.eq.s32.totalorder %s20, 0
      %p89 = por %p87, %p88
      %s91 = sadd.s32 %s90, 1
      %p94 = scmp.eq.s32.totalorder %s14, 3
      %p95 = scmp.ne.s32.totalorder %s90, %s92
      %p96 = scmp.eq.s32.totalorder %s14, 0
      %p97 = por %p95, %p96
      %p98 = scmp.ne.s32.totalorder %s90, %s92
      %p99 = scmp.eq.s32.totalorder %s19, 3
      %p100 = por %p98, %p99
      %p101 = scmp.ne.s32.totalorder %s92, %s93
      %p102 = scmp.eq.s32.totalorder %s19, 0
      %p103 = por %p101, %p102
      %p104 = scmp.ne.s32.totalorder %s92, %s93
      %p105 = scmp.eq.s32.totalorder %s20, 3
      %p106 = por %p104, %p105
      %p108 = scmp.ne.s32.totalorder %s93, %s107
      %p109 = scmp.eq.s32.totalorder %s20, 0
      %p110 = por %p108, %p109
      %s112 = sadd.s32 %s111, 1
      %p115 = scmp.eq.s32.totalorder %s14, 3
      %p116 = scmp.ne.s32.totalorder %s111, %s113
      %p117 = scmp.eq.s32.totalorder %s14, 0
      %p118 = por %p116, %p117
      %p119 = scmp.ne.s32.totalorder %s111, %s113
      %p120 = scmp.eq.s32.totalorder %s19, 3
      %p121 = por %p119, %p120
      %p122 = scmp.ne.s32.totalorder %s113, %s114
      %p123 = scmp.eq.s32.totalorder %s19, 0
      %p124 = por %p122, %p123
      %p125 = scmp.ne.s32.totalorder %s113, %s114
      %p126 = scmp.eq.s32.totalorder %s20, 3
      %p127 = por %p125, %p126
      %p129 = scmp.ne.s32.totalorder %s114, %s128
      %p130 = scmp.eq.s32.totalorder %s20, 0
      %p131 = por %p129, %p130
      %s133 = sadd.s32 %s132, 1
      %p136 = scmp.eq.s32.totalorder %s14, 3
      %p137 = scmp.ne.s32.totalorder %s132, %s134
      %p138 = scmp.eq.s32.totalorder %s14, 0
      %p139 = por %p137, %p138
      %p140 = scmp.ne.s32.totalorder %s132, %s134
      %p141 = scmp.eq.s32.totalorder %s19, 3
      %p142 = por %p140, %p141
      %p143 = scmp.ne.s32.totalorder %s134, %s135
      %p144 = scmp.eq.s32.totalorder %s19, 0
      %p145 = por %p143, %p144
      %p146 = scmp.ne.s32.totalorder %s134, %s135
      %p147 = scmp.eq.s32.totalorder %s20, 3
      %p148 = por %p146, %p147
      %p150 = scmp.ne.s32.totalorder %s135, %s149
      %p151 = scmp.eq.s32.totalorder %s20, 0
      %p152 = por %p150, %p151
      %p153 = scmp.le.s32.totalorder 1, %s14
      %p154 = scmp.lt.s32.totalorder %s14, 5
      %p155 = pnand %p153, %p154
      %p156 = pneg %p155
      // Predicated region
      $region9: #{tpu_custom_call.1} parent=5 // pred_check
        _
      $region10: #{tpu_custom_call.1} parent=5 // pred_check_branch
        %158 = sbr.rel (%p155) target = $region12
      $region11: #{tpu_custom_call.1} parent=5 // pred_region
        %s159 = ssub.s32 %s14, 1
        // Predicated region
        $region13: #{tpu_custom_call.1} parent=11 // pred_check
          %p160 = pneg %p61
        $region14: #{tpu_custom_call.1} parent=11 // pred_check_branch
          %162 = sbr.rel (%p160) target = $region16
        $region15: #{tpu_custom_call.1} parent=11 // pred_region
          _
        $region16: #{tpu_custom_call.1} parent=11 // pred_fallthru
          _
        // Predicated region
        $region17: #{tpu_custom_call.1} parent=11 // pred_check
          %p163 = pneg %p82
        $region18: #{tpu_custom_call.1} parent=11 // pred_check_branch
          %165 = sbr.rel (%p163) target = $region20
        $region19: #{tpu_custom_call.1} parent=11 // pred_region
          _
        $region20: #{tpu_custom_call.1} parent=11 // pred_fallthru
          _
        // Predicated region
        $region21: #{tpu_custom_call.1} parent=11 // pred_check
          %p166 = pneg %p103
        $region22: #{tpu_custom_call.1} parent=11 // pred_check_branch
          %168 = sbr.rel (%p166) target = $region24
        $region23: #{tpu_custom_call.1} parent=11 // pred_region
          _
        $region24: #{tpu_custom_call.1} parent=11 // pred_fallthru
          _
      $region12: #{tpu_custom_call.1} parent=5 // pred_fallthru
        _
      %p169 = scmp.lt.s32.totalorder %s14, 4
      // Predicated region
      $region25: #{tpu_custom_call.1} parent=5 // pred_check
        %p170 = pneg %p169
      $region26: #{tpu_custom_call.1} parent=5 // pred_check_branch
        %172 = sbr.rel (%p170) target = $region28
      $region27: #{tpu_custom_call.1} parent=5 // pred_region
        // Predicated region
        $region29: #{tpu_custom_call.1} parent=27 // pred_check
          %p173 = pneg %p34
        $region30: #{tpu_custom_call.1} parent=27 // pred_check_branch
          %175 = sbr.rel (%p173) target = $region32
        $region31: #{tpu_custom_call.1} parent=27 // pred_region
          %s176 = smul.u32 4, %s14
          %p177 = scmp.lt.s32.totalorder %s176, 15
          %s178 = scalar_select %p177, %s176, 15
          %s179 = smul.addr %s178, 8
          %s180 = scalar_lea.vmem %s0, %s179
          %s181 = smul.u32 4, %s14
        $region32: #{tpu_custom_call.1} parent=27 // pred_fallthru
          _
      $region28: #{tpu_custom_call.1} parent=5 // pred_fallthru
        _
      %p182 = scmp.le.s32.totalorder 1, %s14
      %p183 = scmp.lt.s32.totalorder %s14, 5
      %p184 = pnand %p182, %p183
      %p185 = pneg %p184
      // Predicated region
      $region33: #{tpu_custom_call.1} parent=5 // pred_check
        _
      $region34: #{tpu_custom_call.1} parent=5 // pred_check_branch
        %187 = sbr.rel (%p184) target = $region36
      $region35: #{tpu_custom_call.1} parent=5 // pred_region
        %s188 = ssub.s32 %s14, 1
        %s189 = smul.u32 4, %s19
        %p190 = scmp.lt.s32.totalorder %s189, 15
        %s191 = scalar_select %p190, %s189, 15
        %s192 = smul.addr %s191, 8
        %s193 = scalar_lea.vmem %s0, %s192
        %p194 = pneg %p40
        %p195 = pneg %p37
        %p196 = pneg %p61
        %p197 = pneg %p58
        %p198 = pneg %p82
        %p199 = pneg %p79
        %p200 = pneg %p103
        %p201 = pneg %p100
        %p202 = pneg %p124
        %p203 = pneg %p121
        %p204 = pneg %p145
        %p205 = pneg %p142
        %s206 = smul.u32 4, %s19
        %p207 = scmp.lt.s32.totalorder %s206, 15
        %s208 = scalar_select %p207, %s206, 15
        %s209 = smul.addr %s208, 8
        %s210 = scalar_lea.vmem %s0, %s209
        %s211 = smul.u32 4, %s19
        %p212 = scmp.eq.s32.totalorder %s19, 0
        // Predicated region
        $region37: #{tpu_custom_call.1} parent=35 // pred_check
          %p213 = pneg %p212
        $region38: #{tpu_custom_call.1} parent=35 // pred_check_branch
          %215 = sbr.rel (%p213) target = $region40
        $region39: #{tpu_custom_call.1} parent=35 // pred_region
          %216 = vst [vmem:[#allocation2] sm:$0x1] 0.0
          %217 = vst [vmem:[#allocation3] sm:$0x1] 0.0
        $region40: #{tpu_custom_call.1} parent=35 // pred_fallthru
          _
        %v218 = vld [vmem:[%s210] sm:$0xff]
        %v219 = vld [vmem:[%s210 + $0x8] sm:$0xff]
        %v220 = vld [vmem:[%s210 + $0x10] sm:$0xff]
        %v221 = vld [vmem:[%s210 + $0x18] sm:$0xff]
        %v222 = vld [vmem:[%s1] sm:$0xf]
        %vm223 = vcmask 31744
        %v225 = vsel %vm223, %v218, 0
        %v228 = vsel %vm223, %v219, 0
        %v231 = vsel %vm223, %v220, 0
        %v234 = vsel %vm223, %v221, 0
        %vm236 = vcmask 1043456
        %v238 = vsel %vm236, %v222, 0
        %240 = vmatprep.subr.mxu0 0.0
        %241 = vmatpush1.msra.mxu0 %v238
        %242 = vmatprep.subr.mxu0 0.0
        %243 = vmatpush1.msra.mxu0 0.0
        %244 = vmatprep.subr.mxu0 0.0
        %245 = vmatpush1.msra.mxu0 0.0
        %246 = vmatprep.subr.mxu0 0.0
        %247 = vmatpush1.msra.mxu0 0.0
        %248 = vmatprep.subr.mxu0 0.0
        %249 = vmatpush1.msra.mxu0 0.0
        %250 = vmatprep.subr.mxu0 0.0
        %251 = vmatpush1.msra.mxu0 0.0
        %252 = vmatprep.subr.mxu0 0.0
        %253 = vmatpush1.msra.mxu0 0.0
        %254 = vmatprep.subr.mxu0 0.0
        %255 = vmatpush1.msra.mxu0 0.0
        %256 = vmatprep.subr.mxu0 0.0
        %257 = vmatpush1.msra.mxu0 0.0
        %258 = vmatprep.subr.mxu0 0.0
        %259 = vmatpush1.msra.mxu0 0.0
        %260 = vmatprep.subr.mxu0 0.0
        %261 = vmatpush1.msra.mxu0 0.0
        %262 = vmatprep.subr.mxu0 0.0
        %263 = vmatpush1.msra.mxu0 0.0
        %264 = vmatprep.subr.mxu0 0.0
        %265 = vmatpush1.msra.mxu0 0.0
        %266 = vmatprep.subr.mxu0 0.0
        %267 = vmatpush1.msra.mxu0 0.0
        %268 = vmatprep.subr.mxu0 0.0
        %269 = vmatpush1.msra.mxu0 0.0
        %270 = vmatprep.subr.mxu0 0.0
        %271 = vmatpush1.msra.mxu0 0.0
        %272 = vmatprep.subr.mxu0 0.0
        %273 = vmatpush1.msra.mxu0 0.0
        %274 = vmatprep.subr.mxu0 0.0
        %275 = vmatpush1.msra.mxu0 0.0
        %276 = vmatprep.subr.mxu0 0.0
        %277 = vmatpush1.msra.mxu0 0.0
        %278 = vmatprep.subr.mxu0 0.0
        %279 = vmatpush1.msra.mxu0 0.0
        %280 = vmatprep.subr.mxu0 0.0
        %281 = vmatpush1.msra.mxu0 0.0
        %282 = vmatprep.subr.mxu0 0.0
        %283 = vmatpush1.msra.mxu0 0.0
        %284 = vmatprep.subr.mxu0 0.0
        %285 = vmatpush1.msra.mxu0 0.0
        %286 = vmatprep.subr.mxu0 0.0
        %287 = vmatpush1.msra.mxu0 0.0
        %288 = vmatprep.subr.mxu0 0.0
        %289 = vmatpush1.msra.mxu0 0.0
        %290 = vmatprep.subr.mxu0 0.0
        %291 = vmatpush1.msra.mxu0 0.0
        %292 = vmatprep.subr.mxu0 0.0
        %293 = vmatpush1.msra.mxu0 0.0
        %294 = vmatprep.subr.mxu0 0.0
        %295 = vmatpush1.msra.mxu0 0.0
        %296 = vmatprep.subr.mxu0 0.0
        %297 = vmatpush1.msra.mxu0 0.0
        %298 = vmatprep.subr.mxu0 0.0
        %299 = vmatpush1.msra.mxu0 0.0
        %300 = vmatprep.subr.mxu0 0.0
        %301 = vmatpush1.msra.mxu0 0.0
        %302 = vmatprep.subr.mxu0 0.0
        %303 = vmatpush1.msra.mxu0 0.0
        %304 = vmatprep.mubr.f32.mxu0 0.0
        %305 = vmatmul.mubr.f32.gmra.mrb[0].mxu0 %v225
        %v306 = vpop.f32.mrb[0].mxu0
        %v307 = vadd.f32 0.0, %v306
        %v308 = vpop.f32.mrb[0].mxu0
        %309 = vmatprep.mubr.f32.mxu0 0.0
        %310 = vmatmul.mubr.f32.gmra.mrb[0].mxu0 %v228
        %v311 = vpop.f32.mrb[0].mxu0
        %v312 = vadd.f32 0.0, %v311
        %v313 = vpop.f32.mrb[0].mxu0
        %314 = vmatprep.mubr.f32.mxu0 0.0
        %315 = vmatmul.mubr.f32.gmra.mrb[0].mxu0 %v231
        %v316 = vpop.f32.mrb[0].mxu0
        %v317 = vadd.f32 0.0, %v316
        %v318 = vpop.f32.mrb[0].mxu0
        %319 = vmatprep.mubr.f32.mxu0 0.0
        %320 = vmatmul.mubr.f32.gmra.mrb[0].mxu0 %v234
        %v321 = vpop.f32.mrb[0].mxu0
        %v322 = vadd.f32 0.0, %v321
        %v323 = vpop.f32.mrb[0].mxu0
        %324 = vdwg.mxu0
        %v325 = vld [vmem:[#allocation2] sm:$0x1]
        %v326 = vadd.f32 %v307, %v312
        %v327 = vadd.f32 %v326, %v317
        %v328 = vadd.f32 %v327, %v322
        %v329 = vrot.slane %v328, 4
        %v330 = vadd.f32 %v328, %v329
        %v331 = vrot.slane %v330, 2
        %v332 = vadd.f32 %v330, %v331
        %v333 = vrot.slane %v332, 1
        %v334 = vadd.f32 %v332, %v333
        %v335 = vadd.f32 %v325, %v334
        %336 = vst [vmem:[#allocation2] sm:$0x1] %v335
        %v337 = vld [vmem:[#allocation3] sm:$0x1]
        %v338 = vmul.f32 %v307, %v307
        %v339 = vmul.f32 %v312, %v312
        %v340 = vmul.f32 %v317, %v317
        %v341 = vmul.f32 %v322, %v322
        %v342 = vadd.f32 %v338, %v339
        %v343 = vadd.f32 %v342, %v340
        %v344 = vadd.f32 %v343, %v341
        %v345 = vrot.slane %v344, 4
        %v346 = vadd.f32 %v344, %v345
        %v347 = vrot.slane %v346, 2
        %v348 = vadd.f32 %v346, %v347
        %v349 = vrot.slane %v348, 1
        %v350 = vadd.f32 %v348, %v349
        %v351 = vadd.f32 %v337, %v350
        %352 = vst [vmem:[#allocation3] sm:$0x1] %v351
        %p353 = scmp.eq.s32.totalorder %s19, 3
        // Predicated region
        $region41: #{tpu_custom_call.1} parent=35 // pred_check
          %p354 = pneg %p353
        $region42: #{tpu_custom_call.1} parent=35 // pred_check_branch
          %356 = sbr.rel (%p354) target = $region44
        $region43: #{tpu_custom_call.1} parent=35 // pred_region
          %v357 = vld [vmem:[#allocation2] sm:$0x1]
          %v358 = vmul.f32 %v357, 0.0078125
          %v359 = vld [vmem:[#allocation3] sm:$0x1]
          %v360 = vmul.f32 %v359, 0.0078125
          %v361 = vmul.f32 %v358, %v358
          %v362 = vsub.f32 %v360, %v361
          %v363 = vmax.f32 %v362, 0.0
          %v364 = vld [vmem:[%s2] sm:$0x1]
          %v365 = vadd.f32 %v363, 1e-05
          %v366 = vrsqrt.pop %v365
          %v367 = vmul.f32 %v364, %v366
          %368 = vst [vmem:[#allocation4] sm:$0x1] %v367
          %v369 = vld [vmem:[%s3] sm:$0x1]
          %v370 = vmul.f32 %v358, %v367
          %v371 = vsub.f32 %v369, %v370
          %372 = vst [vmem:[#allocation6] sm:$0x1] %v371
        $region44: #{tpu_custom_call.1} parent=35 // pred_fallthru
          _
        // Predicated region
        $region45: #{tpu_custom_call.1} parent=35 // pred_check
          %p373 = pneg %p121
        $region46: #{tpu_custom_call.1} parent=35 // pred_check_branch
          %375 = sbr.rel (%p373) target = $region48
        $region47: #{tpu_custom_call.1} parent=35 // pred_region
          %s377 = ssub.s32 16, 16
          %378 = vsyncadd [#allocation5], %s377
          %s380 = sshll.u32 [#allocation4], 4
          %s381 = int_to_ptr.vmem [resolvable:$true] %s380
          %383 = dma.vmem_to_hbm [thread:$0]  %s381, 16, %s4, [#allocation5]
        $region48: #{tpu_custom_call.1} parent=35 // pred_fallthru
          _
        // Predicated region
        $region49: #{tpu_custom_call.1} parent=35 // pred_check
          %p384 = pneg %p142
        $region50: #{tpu_custom_call.1} parent=35 // pred_check_branch
          %386 = sbr.rel (%p384) target = $region52
        $region51: #{tpu_custom_call.1} parent=35 // pred_region
          %s388 = ssub.s32 16, 16
          %389 = vsyncadd [#allocation7], %s388
          %s391 = sshll.u32 [#allocation6], 4
          %s392 = int_to_ptr.vmem [resolvable:$true] %s391
          %394 = dma.vmem_to_hbm [thread:$0]  %s392, 16, %s5, [#allocation7]
        $region52: #{tpu_custom_call.1} parent=35 // pred_fallthru
          _
        // Predicated region
        $region53: #{tpu_custom_call.1} parent=35 // pred_check
          %p395 = pneg %p121
        $region54: #{tpu_custom_call.1} parent=35 // pred_check_branch
          %397 = sbr.rel (%p395) target = $region56
        $region55: #{tpu_custom_call.1} parent=35 // pred_region
          %398 = dma.done [#allocation5], 16
        $region56: #{tpu_custom_call.1} parent=35 // pred_fallthru
          _
        // Predicated region
        $region57: #{tpu_custom_call.1} parent=35 // pred_check
          %p399 = pneg %p142
        $region58: #{tpu_custom_call.1} parent=35 // pred_check_branch
          %401 = sbr.rel (%p399) target = $region60
        $region59: #{tpu_custom_call.1} parent=35 // pred_region
          %402 = dma.done [#allocation7], 16
        $region60: #{tpu_custom_call.1} parent=35 // pred_fallthru
          _
      $region36: #{tpu_custom_call.1} parent=5 // pred_fallthru
        _
      %p403 = scmp.le.s32.totalorder 2, %s14
      // Predicated region
      $region61: #{tpu_custom_call.1} parent=5 // pred_check
        %p404 = pneg %p403
      $region62: #{tpu_custom_call.1} parent=5 // pred_check_branch
        %406 = sbr.rel (%p404) target = $region64
      $region63: #{tpu_custom_call.1} parent=5 // pred_region
        %s407 = ssub.s32 %s14, 2
      $region64: #{tpu_custom_call.1} parent=5 // pred_fallthru
        _
    $region6: #{tpu_custom_call.1} parent=1 // loop_footer
      %s18 = sadd.s32 1, %s14
    $region7: #{tpu_custom_call.1} parent=1 // loop_footer_branch
      %13 = sbr.rel target = $region3
    $region8: #{tpu_custom_call.1} parent=1 // loop_exit
      _
    %408 = vsyncpa [#allocation5], 1
    %s409 = scalar_lea.sflag [#allocation5], 1
    %410 = vsyncpa %s409, 1
    %411 = vsyncpa [#allocation7], 1

</llo_original>
